<compile_context>
chip_gen: v5e
topology: v5e:2x2
jax: 0.10.0
libtpu: 0.0.40
codegen_flags: <defaults>
</compile_context>

<pallas_src>
import functools

import jax
import jax.numpy as jnp
import numpy as np
from jax.experimental import pallas as pl
from jax.experimental.pallas import tpu as pltpu


def _round_up(v, m):
    return (v + m - 1) // m * m


def _make_innermost_kernel(N, H, W, Wp, L, compute_dtype):
    cnt = float(N * H * W)
    # roll shift = -offset (mod L);  offset = (dy-1)*Wp + (dx-1)
    row_shifts = (Wp % L, 0, (-Wp) % L)   # dy = 0, 1, 2
    col_shifts = (1 % L, 0, (-1) % L)     # dx = 0, 1, 2

    def stack_taps(slab):
        # slab: (C, L) f32.  Returns the im2col tap-stacked (9*C, L) operand whose
        # sublane index is dx*3*C + dy*C + ci and whose column c holds
        # slab[ci, c + (dy-1)*Wp + (dx-1)]  (cyclic wrap lands in the zero margin).
        # 4 XLU rolls + 2 sublane-aligned concats -- no lane-unaligned slices.
        rows = [slab if s == 0 else pltpu.roll(slab, s, axis=1) for s in row_shifts]
        b = jnp.concatenate(rows, axis=0)                       # (3*C, L)
        cols = [b if s == 0 else pltpu.roll(b, s, axis=1) for s in col_shifts]
        return jnp.concatenate(cols, axis=0)                    # (9*C, L)

    def kernel(x_ref, w1_ref, w2_ref, g_ref, b_ref, m_ref, y_ref):
        # x_ref : (Cin_p , L) f32          flattened zero-padded image grid, lane-padded
        # w1_ref: (Cmid_p, 9*Cin_p )       tap-fused downconv weight (compute_dtype)
        # w2_ref: (Cout_p, 9*Cmid_p)       tap-fused upconv weight   (compute_dtype)
        # g_ref : (Cout_p, 1) f32  gamma   b_ref : (Cout_p, 1) f32  beta
        # m_ref : (1, L) f32               1.0 at interior (true-pixel) columns, else 0
        # y_ref : (Cout_p, L) f32          dense output slab (cropped in the wrapper)
        mask = m_ref[...]

        # downrelu: LeakyReLU(0.2) applied once to the whole slab (zero pad stays zero).
        x = x_ref[...]
        a = jnp.where(x > 0, x, 0.2 * x)

        # downconv: ONE MXU matmul -- 9 taps fused into the contraction dimension.
        rhs1 = stack_taps(a).astype(compute_dtype)              # (9*Cin_p, L)
        acc1 = jnp.dot(w1_ref[...], rhs1, preferred_element_type=jnp.float32)

        # uprelu + zero the halo/pad columns: this IS the zero-padded intermediate,
        # kept in registers (no VMEM scratch round-trip, no masked partial stores).
        mid = jnp.maximum(acc1, 0.0) * mask                     # (Cmid_p, L) f32

        # upconv: ONE MXU matmul, then LeakyReLU(0.2).
        rhs2 = stack_taps(mid).astype(compute_dtype)            # (9*Cmid_p, L)
        acc2 = jnp.dot(w2_ref[...], rhs2, preferred_element_type=jnp.float32)
        z = jnp.where(acc2 > 0, acc2, 0.2 * acc2)               # (Cout_p, L) f32

        # upnorm: BatchNorm2d, training-mode batch stats (biased var, eps=1e-5).
        # Reduced N*H*W axis is the lane axis; halo/pad columns masked out of stats.
        mean = jnp.sum(z * mask, axis=-1, keepdims=True) / cnt  # (Cout_p, 1)
        d = (z - mean) * mask
        var = jnp.sum(d * d, axis=-1, keepdims=True) / cnt
        inv = jax.lax.rsqrt(var + 1e-5)
        y_ref[...] = ((z - mean) * inv * g_ref[...] + b_ref[...]).astype(y_ref.dtype)

    return kernel


def unet_skip_block_dc(x_nchw, w_down, w_up, gamma, beta, *, compute_dtype=jnp.bfloat16):
    """Innermost UnetSkipConnectionBlock_DC forward: torch.cat([x, block(x)], dim=1).

    x_nchw : (N, Cin, H, W)     NCHW input
    w_down : (Cmid, Cin, 3, 3)  OIHW conv weight (no bias)
    w_up   : (Cout, Cmid, 3, 3) OIHW conv weight (no bias)
    gamma, beta : (Cout,)       BatchNorm2d affine params
    compute_dtype: MXU operand dtype (bf16 default for v6e/v7x); accumulation and all
                   elementwise / BatchNorm math stay f32 (v5e has no bf16 VPU/EUP).
    """
    N, Cin, H, W = (int(d) for d in x_nchw.shape)
    Cmid, Cout = int(w_down.shape[0]), int(w_up.shape[0])
    Hp, Wp = H + 2, W + 2
    Rp = N * Hp * Wp                         # columns of the flattened padded grid
    M = Wp + 1                               # max |column offset| of a 3x3 tap
    Cin_p, Cmid_p, Cout_p = (_round_up(c, 8) for c in (Cin, Cmid, Cout))
    L = _round_up(Rp + M, 128)               # lane-dense width; >= M zero-cols for wrap

    # ---- layout plumbing (fused by XLA inside the surrounding jit) ----
    x_c = jnp.transpose(x_nchw, (1, 0, 2, 3)).astype(jnp.float32)        # (Cin,N,H,W)
    x_p = jnp.pad(x_c, ((0, Cin_p - Cin), (0, 0), (1, 1), (1, 1)))       # (Cin_p,N,Hp,Wp)
    x_slab = jnp.pad(x_p.reshape(Cin_p, Rp), ((0, 0), (0, L - Rp)))      # (Cin_p,L)

    def fuse_w(w, Co, Ci, Co_p, Ci_p):
        # OIHW -> (Co_p, 9*Ci_p); contraction index = kx*3*Ci_p + ky*Ci_p + ci,
        # matching the tap-stacked RHS built in-kernel.
        wt = jnp.transpose(w, (0, 3, 2, 1)).astype(jnp.float32)          # (Co,Kx,Ky,Ci)
        wt = jnp.pad(wt, ((0, Co_p - Co), (0, 0), (0, 0), (0, Ci_p - Ci)))
        return wt.reshape(Co_p, 9 * Ci_p).astype(compute_dtype)

    w1f = fuse_w(w_down, Cmid, Cin, Cmid_p, Cin_p)                       # (Cmid_p,9*Cin_p)
    w2f = fuse_w(w_up, Cout, Cmid, Cout_p, Cmid_p)                       # (Cout_p,9*Cmid_p)
    g2 = jnp.pad(gamma.astype(jnp.float32), (0, Cout_p - Cout),
                 constant_values=1.0).reshape(Cout_p, 1)
    b2 = jnp.pad(beta.astype(jnp.float32), (0, Cout_p - Cout)).reshape(Cout_p, 1)

    # Static interior ("true pixel") mask of the flattened padded grid, lane-padded.
    pos = np.arange(L)
    rem = pos % (Hp * Wp)
    yg, xg = rem // Wp, rem % Wp
    interior = (pos < Rp) & (yg >= 1) & (yg <= H) & (xg >= 1) & (xg <= W)
    assert int(interior.sum()) == N * H * W
    mask = jnp.asarray(interior.astype(np.float32).reshape(1, L))

    kernel = _make_innermost_kernel(N, H, W, Wp, L, compute_dtype)

    # VMEM budget derived from actual buffers (with headroom), not a flat 32 MiB.
    itemsize = np.dtype(compute_dtype).itemsize
    io_bytes = (4 * (x_slab.size + mask.size + Cout_p * L + 2 * Cout_p)
                + itemsize * (w1f.size + w2f.size))
    scratch_bytes = 2 * 9 * max(Cin_p, Cmid_p) * L * (4 + itemsize)      # tap-stacked RHS
    vmem_limit = min(32 << 20, _round_up(8 * (io_bytes + scratch_bytes), 1 << 20))
    flops = 2 * L * 9 * (Cmid_p * Cin_p + Cout_p * Cmid_p)

    y = pl.pallas_call(
        kernel,
        out_shape=jax.ShapeDtypeStruct((Cout_p, L), jnp.float32),
        in_specs=[pl.BlockSpec(memory_space=pltpu.MemorySpace.VMEM)] * 6,
        out_specs=pl.BlockSpec(memory_space=pltpu.MemorySpace.VMEM),
        compiler_params=pltpu.CompilerParams(vmem_limit_bytes=int(vmem_limit)),
        cost_estimate=pl.CostEstimate(flops=int(flops), transcendentals=int(Cout_p),
                                      bytes_accessed=int(io_bytes)),
    )(x_slab, w1f, w2f, g2, b2, mask)

    # Dense (Cout_p, L) slab -> crop valid channels/columns -> NCHW; skip-concat in XLA.
    y_grid = y[:Cout, :Rp].reshape(Cout, N, Hp, Wp)
    y_nchw = jnp.transpose(y_grid[:, :, 1:H + 1, 1:W + 1], (1, 0, 2, 3))
    return jnp.concatenate([x_nchw.astype(jnp.float32), y_nchw], axis=1)


def _ref_forward(x, w_down, w_up, gamma, beta):
    """Pure-JAX reference mirroring the PyTorch module (NCHW)."""
    def conv(h, w):
        return jax.lax.conv_general_dilated(
            h, w, window_strides=(1, 1), padding=((1, 1), (1, 1)),
            dimension_numbers=("NCHW", "OIHW", "NCHW"))

    h = jnp.where(x > 0, x, 0.2 * x)           # downrelu
    h = conv(h, w_down)                         # downconv
    h = jnp.maximum(h, 0.0)                     # uprelu
    h = conv(h, w_up)                           # upconv conv
    h = jnp.where(h > 0, h, 0.2 * h)            # upconv LeakyReLU
    mean = jnp.mean(h, axis=(0, 2, 3), keepdims=True)
    var = jnp.mean((h - mean) ** 2, axis=(0, 2, 3), keepdims=True)
    h = (h - mean) / jnp.sqrt(var + 1e-5)
    h = h * gamma.reshape(1, -1, 1, 1) + beta.reshape(1, -1, 1, 1)
    return jnp.concatenate([x, h], axis=1)


if __name__ == "__main__":
    outer_nc, inner_nc = 4, 8     # input_nc defaults to outer_nc
    N, H, W = 2, 16, 16

    key = jax.random.PRNGKey(0)
    kx, k1, k2 = jax.random.split(key, 3)
    x = jax.random.normal(kx, (N, outer_nc, H, W), jnp.float32)
    w_down = jax.random.normal(k1, (inner_nc, outer_nc, 3, 3), jnp.float32) * 0.2
    w_up = jax.random.normal(k2, (outer_nc, inner_nc, 3, 3), jnp.float32) * 0.2
    gamma = jnp.ones((outer_nc,), jnp.float32)   # BatchNorm2d default init
    beta = jnp.zeros((outer_nc,), jnp.float32)

    ref = jax.block_until_ready(_ref_forward(x, w_down, w_up, gamma, beta))

    # f32 MXU operands: tight-tolerance numerical check.
    fwd_f32 = jax.jit(functools.partial(unet_skip_block_dc, compute_dtype=jnp.float32))
    out_f32 = jax.block_until_ready(fwd_f32(x, w_down, w_up, gamma, beta))
    assert out_f32.shape == (N, 2 * outer_nc, H, W), out_f32.shape
    np.testing.assert_allclose(np.asarray(out_f32), np.asarray(ref), rtol=1e-3, atol=1e-3)

    # bf16 MXU operands (default; v6e/v7x-native): f32 accumulation, looser tolerance.
    fwd_bf16 = jax.jit(functools.partial(unet_skip_block_dc, compute_dtype=jnp.bfloat16))
    out_bf16 = jax.block_until_ready(fwd_bf16(x, w_down, w_up, gamma, beta))
    assert out_bf16.shape == (N, 2 * outer_nc, H, W), out_bf16.shape
    np.testing.assert_allclose(np.asarray(out_bf16), np.asarray(ref), rtol=5e-2, atol=5e-2)

    print("KERNEL_OK")
</pallas_src>

<mosaic_0001>
module attributes {stable_mosaic.version = 11 : i64} {
  func.func @kernel(%arg0: memref<8x768xf32, #tpu.memory_space<vmem>>, %arg1: memref<8x72xf32, #tpu.memory_space<vmem>>, %arg2: memref<8x72xf32, #tpu.memory_space<vmem>>, %arg3: memref<8x1xf32, #tpu.memory_space<vmem>>, %arg4: memref<8x1xf32, #tpu.memory_space<vmem>>, %arg5: memref<1x768xf32, #tpu.memory_space<vmem>>, %arg6: memref<8x768xf32, #tpu.memory_space<vmem>>) attributes {dimension_semantics = [], scalar_prefetch = 0 : i64, scratch_operands = 0 : i64, tpu.core_type = #tpu.core_type<tc>} {
    %c0 = arith.constant 0 : index
    %c0_0 = arith.constant 0 : index
    %0 = vector.load %arg5[%c0, %c0_0] : memref<1x768xf32, #tpu.memory_space<vmem>>, vector<1x768xf32>
    %c0_1 = arith.constant 0 : index
    %c0_2 = arith.constant 0 : index
    %1 = vector.load %arg0[%c0_1, %c0_2] : memref<8x768xf32, #tpu.memory_space<vmem>>, vector<8x768xf32>
    %cst = arith.constant 0.000000e+00 : f32
    %2 = vector.broadcast %cst : f32 to vector<8x768xf32>
    %3 = arith.cmpf ogt, %1, %2 : vector<8x768xf32>
    %cst_3 = arith.constant 2.000000e-01 : f32
    %4 = vector.broadcast %cst_3 : f32 to vector<8x768xf32>
    %5 = arith.mulf %4, %1 : vector<8x768xf32>
    %6 = arith.select %3, %1, %5 : vector<8x768xi1>, vector<8x768xf32>
    %c18_i32 = arith.constant 18 : i32
    %7 = tpu.dynamic_rotate %6 by %c18_i32 dim 1 : vector<8x768xf32>, i32 -> vector<8x768xf32>
    %c750_i32 = arith.constant 750 : i32
    %8 = tpu.dynamic_rotate %6 by %c750_i32 dim 1 : vector<8x768xf32>, i32 -> vector<8x768xf32>
    %9 = tpu.concatenate %7, %6, %8 in 0 : vector<8x768xf32>, vector<8x768xf32>, vector<8x768xf32> -> vector<24x768xf32>
    %c1_i32 = arith.constant 1 : i32
    %10 = tpu.dynamic_rotate %9 by %c1_i32 dim 1 : vector<24x768xf32>, i32 -> vector<24x768xf32>
    %c767_i32 = arith.constant 767 : i32
    %11 = tpu.dynamic_rotate %9 by %c767_i32 dim 1 : vector<24x768xf32>, i32 -> vector<24x768xf32>
    %12 = tpu.concatenate %10, %9, %11 in 0 : vector<24x768xf32>, vector<24x768xf32>, vector<24x768xf32> -> vector<72x768xf32>
    %c0_4 = arith.constant 0 : index
    %c0_5 = arith.constant 0 : index
    %13 = vector.load %arg1[%c0_4, %c0_5] : memref<8x72xf32, #tpu.memory_space<vmem>>, vector<8x72xf32>
    %cst_6 = arith.constant dense<0.000000e+00> : vector<8x768xf32>
    %14 = tpu.matmul %13, %12, %cst_6 {dimension_numbers = #tpu.dot_dimension_numbers<[1], [0], [0], [1], [0, 0, 1, 1], [], []>} : vector<8x72xf32>, vector<72x768xf32>, vector<8x768xf32> -> vector<8x768xf32>
    %cst_7 = arith.constant 0.000000e+00 : f32
    %15 = vector.broadcast %cst_7 : f32 to vector<8x768xf32>
    %16 = arith.maximumf %14, %15 : vector<8x768xf32>
    %17 = vector.broadcast %0 : vector<1x768xf32> to vector<8x768xf32>
    %18 = arith.mulf %16, %17 : vector<8x768xf32>
    %c18_i32_8 = arith.constant 18 : i32
    %19 = tpu.dynamic_rotate %18 by %c18_i32_8 dim 1 : vector<8x768xf32>, i32 -> vector<8x768xf32>
    %c750_i32_9 = arith.constant 750 : i32
    %20 = tpu.dynamic_rotate %18 by %c750_i32_9 dim 1 : vector<8x768xf32>, i32 -> vector<8x768xf32>
    %21 = tpu.concatenate %19, %18, %20 in 0 : vector<8x768xf32>, vector<8x768xf32>, vector<8x768xf32> -> vector<24x768xf32>
    %c1_i32_10 = arith.constant 1 : i32
    %22 = tpu.dynamic_rotate %21 by %c1_i32_10 dim 1 : vector<24x768xf32>, i32 -> vector<24x768xf32>
    %c767_i32_11 = arith.constant 767 : i32
    %23 = tpu.dynamic_rotate %21 by %c767_i32_11 dim 1 : vector<24x768xf32>, i32 -> vector<24x768xf32>
    %24 = tpu.concatenate %22, %21, %23 in 0 : vector<24x768xf32>, vector<24x768xf32>, vector<24x768xf32> -> vector<72x768xf32>
    %c0_12 = arith.constant 0 : index
    %c0_13 = arith.constant 0 : index
    %25 = vector.load %arg2[%c0_12, %c0_13] : memref<8x72xf32, #tpu.memory_space<vmem>>, vector<8x72xf32>
    %cst_14 = arith.constant dense<0.000000e+00> : vector<8x768xf32>
    %26 = tpu.matmul %25, %24, %cst_14 {dimension_numbers = #tpu.dot_dimension_numbers<[1], [0], [0], [1], [0, 0, 1, 1], [], []>} : vector<8x72xf32>, vector<72x768xf32>, vector<8x768xf32> -> vector<8x768xf32>
    %cst_15 = arith.constant 0.000000e+00 : f32
    %27 = vector.broadcast %cst_15 : f32 to vector<8x768xf32>
    %28 = arith.cmpf ogt, %26, %27 : vector<8x768xf32>
    %cst_16 = arith.constant 2.000000e-01 : f32
    %29 = vector.broadcast %cst_16 : f32 to vector<8x768xf32>
    %30 = arith.mulf %29, %26 : vector<8x768xf32>
    %31 = arith.select %28, %26, %30 : vector<8x768xi1>, vector<8x768xf32>
    %32 = vector.broadcast %0 : vector<1x768xf32> to vector<8x768xf32>
    %33 = arith.mulf %31, %32 : vector<8x768xf32>
    %cst_17 = arith.constant dense<0.000000e+00> : vector<8xf32>
    %34 = vector.multi_reduction <add>, %33, %cst_17 [1] : vector<8x768xf32> to vector<8xf32>
    %35 = vector.shape_cast %34 : vector<8xf32> to vector<8x1xf32>
    %cst_18 = arith.constant 5.120000e+02 : f32
    %36 = vector.broadcast %cst_18 : f32 to vector<8x1xf32>
    %37 = arith.divf %35, %36 : vector<8x1xf32>
    %38 = vector.broadcast %37 : vector<8x1xf32> to vector<8x768xf32>
    %39 = arith.subf %31, %38 : vector<8x768xf32>
    %40 = vector.broadcast %0 : vector<1x768xf32> to vector<8x768xf32>
    %41 = arith.mulf %39, %40 : vector<8x768xf32>
    %42 = arith.mulf %41, %41 : vector<8x768xf32>
    %cst_19 = arith.constant dense<0.000000e+00> : vector<8xf32>
    %43 = vector.multi_reduction <add>, %42, %cst_19 [1] : vector<8x768xf32> to vector<8xf32>
    %44 = vector.shape_cast %43 : vector<8xf32> to vector<8x1xf32>
    %cst_20 = arith.constant 5.120000e+02 : f32
    %45 = vector.broadcast %cst_20 : f32 to vector<8x1xf32>
    %46 = arith.divf %44, %45 : vector<8x1xf32>
    %cst_21 = arith.constant 9.99999974E-6 : f32
    %47 = vector.broadcast %cst_21 : f32 to vector<8x1xf32>
    %48 = arith.addf %46, %47 : vector<8x1xf32>
    %49 = math.rsqrt %48 : vector<8x1xf32>
    %50 = vector.broadcast %37 : vector<8x1xf32> to vector<8x768xf32>
    %51 = arith.subf %31, %50 : vector<8x768xf32>
    %52 = vector.broadcast %49 : vector<8x1xf32> to vector<8x768xf32>
    %53 = arith.mulf %51, %52 : vector<8x768xf32>
    %c0_22 = arith.constant 0 : index
    %c0_23 = arith.constant 0 : index
    %54 = vector.load %arg3[%c0_22, %c0_23] : memref<8x1xf32, #tpu.memory_space<vmem>>, vector<8x1xf32>
    %55 = vector.broadcast %54 : vector<8x1xf32> to vector<8x768xf32>
    %56 = arith.mulf %53, %55 : vector<8x768xf32>
    %c0_24 = arith.constant 0 : index
    %c0_25 = arith.constant 0 : index
    %57 = vector.load %arg4[%c0_24, %c0_25] : memref<8x1xf32, #tpu.memory_space<vmem>>, vector<8x1xf32>
    %58 = vector.broadcast %57 : vector<8x1xf32> to vector<8x768xf32>
    %59 = arith.addf %56, %58 : vector<8x768xf32>
    %c0_26 = arith.constant 0 : index
    %c0_27 = arith.constant 0 : index
    %60 = vector.load %arg6[%c0_26, %c0_27] : memref<8x768xf32, #tpu.memory_space<vmem>>, vector<8x768xf32>
    tpu.vector_store %arg6[%c0_26, %c0_27], %59 {strides = array<i32>} : memref<8x768xf32, #tpu.memory_space<vmem>>, vector<8x768xf32>,
    return
  }
}

</mosaic_0001>

<llo_original>
// kernel: unet_skip_block_dc.1
$region0: #{unet_skip_block_dc.1}
  #allocation0 [shape = 'u32[]', space=smem, size = 0x4, offset = 0x4, fixed_abs, tag = 'smem constant byte address 0x4 - core index']
  #allocation1 [shape = 'u32[72,128]{1,0:T(1,128)}', space=vmem, size = 0x9000, scoped, tag = 'internal scratch']
  %s0 = inlined_call_operand.vmem [shape: f32[8,768], index: 0, kind: input, shape index: {}]
  %s1 = inlined_call_operand.vmem [shape: f32[8,72], index: 1, kind: input, shape index: {}]
  %s2 = inlined_call_operand.vmem [shape: f32[8,72], index: 2, kind: input, shape index: {}]
  %s3 = inlined_call_operand.vmem [shape: f32[8,1], index: 3, kind: input, shape index: {}]
  %s4 = inlined_call_operand.vmem [shape: f32[8,1], index: 4, kind: input, shape index: {}]
  %s5 = inlined_call_operand.vmem [shape: f32[1,768], index: 5, kind: input, shape index: {}]
  %s6 = inlined_call_operand.vmem [shape: f32[8,768], index: 6, kind: output, shape index: {}]
  %s7 = sld [smem:[#allocation0]]
  $region34: #{unet_skip_block_dc.1} parent=0
    _
  %s9 = ssub.s32 1, %s7
  %s10 = scalar_select 0, %s9, %s7
  // Predicated region
  $region2: #{unet_skip_block_dc.1} parent=0 // pred_check
    _
  $region3: #{unet_skip_block_dc.1} parent=0 // pred_check_branch
    %12 = sbr.rel (0) target = $region5
  $region4: #{unet_skip_block_dc.1} parent=0 // pred_region
    _
  $region5: #{unet_skip_block_dc.1} parent=0 // pred_fallthru
    _
  // Predicated region
  $region6: #{unet_skip_block_dc.1} parent=0 // pred_check
    _
  $region7: #{unet_skip_block_dc.1} parent=0 // pred_check_branch
    %14 = sbr.rel (0) target = $region9
  $region8: #{unet_skip_block_dc.1} parent=0 // pred_region
    _
  $region9: #{unet_skip_block_dc.1} parent=0 // pred_fallthru
    _
  // Predicated region
  $region10: #{unet_skip_block_dc.1} parent=0 // pred_check
    _
  $region11: #{unet_skip_block_dc.1} parent=0 // pred_check_branch
    %16 = sbr.rel (0) target = $region13
  $region12: #{unet_skip_block_dc.1} parent=0 // pred_region
    _
  $region13: #{unet_skip_block_dc.1} parent=0 // pred_fallthru
    _
  // Predicated region
  $region14: #{unet_skip_block_dc.1} parent=0 // pred_check
    _
  $region15: #{unet_skip_block_dc.1} parent=0 // pred_check_branch
    %18 = sbr.rel (0) target = $region17
  $region16: #{unet_skip_block_dc.1} parent=0 // pred_region
    _
  $region17: #{unet_skip_block_dc.1} parent=0 // pred_fallthru
    _
  // Predicated region
  $region18: #{unet_skip_block_dc.1} parent=0 // pred_check
    _
  $region19: #{unet_skip_block_dc.1} parent=0 // pred_check_branch
    %20 = sbr.rel (0) target = $region21
  $region20: #{unet_skip_block_dc.1} parent=0 // pred_region
    _
  $region21: #{unet_skip_block_dc.1} parent=0 // pred_fallthru
    _
  // Predicated region
  $region22: #{unet_skip_block_dc.1} parent=0 // pred_check
    _
  $region23: #{unet_skip_block_dc.1} parent=0 // pred_check_branch
    %22 = sbr.rel (0) target = $region25
  $region24: #{unet_skip_block_dc.1} parent=0 // pred_region
    _
  $region25: #{unet_skip_block_dc.1} parent=0 // pred_fallthru
    _
  %v23 = vld [vmem:[%s5] sm:$0x3f]
  %v24 = vld [vmem:[%s0] sm:$0xff]
  %v25 = vld [vmem:[%s0 + $0x8] sm:$0xff]
  %v26 = vld [vmem:[%s0 + $0x10] sm:$0xff]
  %v27 = vld [vmem:[%s0 + $0x18] sm:$0xff]
  %v28 = vld [vmem:[%s0 + $0x20] sm:$0xff]
  %v29 = vld [vmem:[%s0 + $0x28] sm:$0xff]
  %vm30 = vcmp.gt.f32.partialorder %v24, 0.0
  %vm31 = vcmp.gt.f32.partialorder %v25, 0.0
  %vm32 = vcmp.gt.f32.partialorder %v26, 0.0
  %vm33 = vcmp.gt.f32.partialorder %v27, 0.0
  %vm34 = vcmp.gt.f32.partialorder %v28, 0.0
  %vm35 = vcmp.gt.f32.partialorder %v29, 0.0
  %v36 = vmul.f32 %v24, 0.2
  %v37 = vmul.f32 %v25, 0.2
  %v38 = vmul.f32 %v26, 0.2
  %v39 = vmul.f32 %v27, 0.2
  %v40 = vmul.f32 %v28, 0.2
  %v41 = vmul.f32 %v29, 0.2
  %v42 = vsel %vm30, %v24, %v36
  %v43 = vsel %vm31, %v25, %v37
  %v44 = vsel %vm32, %v26, %v38
  %v45 = vsel %vm33, %v27, %v39
  %v46 = vsel %vm34, %v28, %v40
  %v47 = vsel %vm35, %v29, %v41
  %48 = vrot.lane.b32.xlu0 %v42, 18
  %v49 = vpop.permute.xlu0 %48
  %50 = vrot.lane.b32.xlu0 %v43, 18
  %v51 = vpop.permute.xlu0 %50
  %52 = vrot.lane.b32.xlu0 %v44, 18
  %v53 = vpop.permute.xlu0 %52
  %54 = vrot.lane.b32.xlu0 %v45, 18
  %v55 = vpop.permute.xlu0 %54
  %56 = vrot.lane.b32.xlu0 %v46, 18
  %v57 = vpop.permute.xlu0 %56
  %58 = vrot.lane.b32.xlu0 %v47, 18
  %v59 = vpop.permute.xlu0 %58
  %v60 = vlaneseq
  %v61 = vand.u32 %v60, 127
  %vm62 = vcmp.lt.s32.totalorder %v61, 18
  %v63 = vsel %vm62, %v57, %v59
  %v64 = vsel %vm62, %v55, %v57
  %v65 = vsel %vm62, %v53, %v55
  %v66 = vsel %vm62, %v51, %v53
  %v67 = vsel %vm62, %v49, %v51
  %v68 = vsel %vm62, %v59, %v49
  %69 = vrot.lane.b32.xlu0 %v42, 110
  %v70 = vpop.permute.xlu0 %69
  %71 = vrot.lane.b32.xlu0 %v43, 110
  %v72 = vpop.permute.xlu0 %71
  %73 = vrot.lane.b32.xlu0 %v44, 110
  %v74 = vpop.permute.xlu0 %73
  %75 = vrot.lane.b32.xlu0 %v45, 110
  %v76 = vpop.permute.xlu0 %75
  %77 = vrot.lane.b32.xlu0 %v46, 110
  %v78 = vpop.permute.xlu0 %77
  %79 = vrot.lane.b32.xlu0 %v47, 110
  %v80 = vpop.permute.xlu0 %79
  %vm81 = vcmp.lt.s32.totalorder %v61, 110
  %v82 = vsel %vm81, %v78, %v80
  %v83 = vsel %vm81, %v76, %v78
  %v84 = vsel %vm81, %v74, %v76
  %v85 = vsel %vm81, %v72, %v74
  %v86 = vsel %vm81, %v70, %v72
  %v87 = vsel %vm81, %v80, %v70
  %88 = vrot.lane.b32.xlu0 %v68, 1
  %v89 = vpop.permute.xlu0 %88
  %90 = vrot.lane.b32.xlu0 %v42, 1
  %v91 = vpop.permute.xlu0 %90
  %92 = vrot.lane.b32.xlu0 %v86, 1
  %v93 = vpop.permute.xlu0 %92
  %94 = vrot.lane.b32.xlu0 %v67, 1
  %v95 = vpop.permute.xlu0 %94
  %96 = vrot.lane.b32.xlu0 %v43, 1
  %v97 = vpop.permute.xlu0 %96
  %98 = vrot.lane.b32.xlu0 %v85, 1
  %v99 = vpop.permute.xlu0 %98
  %100 = vrot.lane.b32.xlu0 %v66, 1
  %v101 = vpop.permute.xlu0 %100
  %102 = vrot.lane.b32.xlu0 %v44, 1
  %v103 = vpop.permute.xlu0 %102
  %104 = vrot.lane.b32.xlu0 %v84, 1
  %v105 = vpop.permute.xlu0 %104
  %106 = vrot.lane.b32.xlu0 %v65, 1
  %v107 = vpop.permute.xlu0 %106
  %108 = vrot.lane.b32.xlu0 %v45, 1
  %v109 = vpop.permute.xlu0 %108
  %110 = vrot.lane.b32.xlu0 %v83, 1
  %v111 = vpop.permute.xlu0 %110
  %112 = vrot.lane.b32.xlu0 %v64, 1
  %v113 = vpop.permute.xlu0 %112
  %114 = vrot.lane.b32.xlu0 %v46, 1
  %v115 = vpop.permute.xlu0 %114
  %116 = vrot.lane.b32.xlu0 %v82, 1
  %v117 = vpop.permute.xlu0 %116
  %118 = vrot.lane.b32.xlu0 %v63, 1
  %v119 = vpop.permute.xlu0 %118
  %120 = vrot.lane.b32.xlu0 %v47, 1
  %v121 = vpop.permute.xlu0 %120
  %122 = vrot.lane.b32.xlu0 %v87, 1
  %v123 = vpop.permute.xlu0 %122
  %vm124 = vcmp.lt.s32.totalorder %v61, 1
  %v125 = vsel %vm124, %v113, %v119
  %v126 = vsel %vm124, %v115, %v121
  %v127 = vsel %vm124, %v117, %v123
  %v128 = vsel %vm124, %v107, %v113
  %v129 = vsel %vm124, %v109, %v115
  %v130 = vsel %vm124, %v111, %v117
  %v131 = vsel %vm124, %v101, %v107
  %v132 = vsel %vm124, %v103, %v109
  %v133 = vsel %vm124, %v105, %v111
  %v134 = vsel %vm124, %v95, %v101
  %v135 = vsel %vm124, %v97, %v103
  %v136 = vsel %vm124, %v99, %v105
  %v137 = vsel %vm124, %v89, %v95
  %v138 = vsel %vm124, %v91, %v97
  %v139 = vsel %vm124, %v93, %v99
  %v140 = vsel %vm124, %v119, %v89
  %v141 = vsel %vm124, %v121, %v91
  %v142 = vsel %vm124, %v123, %v93
  %143 = vrot.lane.b32.xlu0 %v68, 127
  %v144 = vpop.permute.xlu0 %143
  %145 = vrot.lane.b32.xlu0 %v42, 127
  %v146 = vpop.permute.xlu0 %145
  %147 = vrot.lane.b32.xlu0 %v86, 127
  %v148 = vpop.permute.xlu0 %147
  %149 = vrot.lane.b32.xlu0 %v67, 127
  %v150 = vpop.permute.xlu0 %149
  %151 = vrot.lane.b32.xlu0 %v43, 127
  %v152 = vpop.permute.xlu0 %151
  %153 = vrot.lane.b32.xlu0 %v85, 127
  %v154 = vpop.permute.xlu0 %153
  %155 = vrot.lane.b32.xlu0 %v66, 127
  %v156 = vpop.permute.xlu0 %155
  %157 = vrot.lane.b32.xlu0 %v44, 127
  %v158 = vpop.permute.xlu0 %157
  %159 = vrot.lane.b32.xlu0 %v84, 127
  %v160 = vpop.permute.xlu0 %159
  %161 = vrot.lane.b32.xlu0 %v65, 127
  %v162 = vpop.permute.xlu0 %161
  %163 = vrot.lane.b32.xlu0 %v45, 127
  %v164 = vpop.permute.xlu0 %163
  %165 = vrot.lane.b32.xlu0 %v83, 127
  %v166 = vpop.permute.xlu0 %165
  %167 = vrot.lane.b32.xlu0 %v64, 127
  %v168 = vpop.permute.xlu0 %167
  %169 = vrot.lane.b32.xlu0 %v46, 127
  %v170 = vpop.permute.xlu0 %169
  %171 = vrot.lane.b32.xlu0 %v82, 127
  %v172 = vpop.permute.xlu0 %171
  %173 = vrot.lane.b32.xlu0 %v63, 127
  %v174 = vpop.permute.xlu0 %173
  %175 = vrot.lane.b32.xlu0 %v47, 127
  %v176 = vpop.permute.xlu0 %175
  %177 = vrot.lane.b32.xlu0 %v87, 127
  %v178 = vpop.permute.xlu0 %177
  %vm179 = vcmp.lt.s32.totalorder %v61, 127
  %v180 = vsel %vm179, %v168, %v174
  %v181 = vsel %vm179, %v170, %v176
  %v182 = vsel %vm179, %v172, %v178
  %v183 = vsel %vm179, %v162, %v168
  %v184 = vsel %vm179, %v164, %v170
  %v185 = vsel %vm179, %v166, %v172
  %v186 = vsel %vm179, %v156, %v162
  %v187 = vsel %vm179, %v158, %v164
  %v188 = vsel %vm179, %v160, %v166
  %v189 = vsel %vm179, %v150, %v156
  %v190 = vsel %vm179, %v152, %v158
  %v191 = vsel %vm179, %v154, %v160
  %v192 = vsel %vm179, %v144, %v150
  %v193 = vsel %vm179, %v146, %v152
  %v194 = vsel %vm179, %v148, %v154
  %v195 = vsel %vm179, %v174, %v144
  %v196 = vsel %vm179, %v176, %v146
  %v197 = vsel %vm179, %v178, %v148
  %v198 = vld [vmem:[%s1] sm:$0xff]
  %vm199 = vcmask 588800
  %v201 = vsel %vm199, %v198, 0
  %203 = vmatpush.msra.mxu0 0.0
  %204 = vmatpush.msra.mxu0 0.0
  %205 = vmatpush.msra.mxu0 0.0
  %206 = vmatpush.msra.mxu0 0.0
  %207 = vmatpush.msra.mxu0 0.0
  %208 = vmatpush.msra.mxu0 0.0
  %209 = vmatpush.msra.mxu0 0.0
  %210 = vmatpush.msra.mxu0 %v194
  %211 = vmatpush.msra.mxu0 %v193
  %212 = vmatpush.msra.mxu0 %v192
  %213 = vmatpush.msra.mxu0 %v86
  %214 = vmatpush.msra.mxu0 %v42
  %215 = vmatpush.msra.mxu0 %v68
  %216 = vmatpush.msra.mxu0 %v142
  %217 = vmatpush.msra.mxu0 %v141
  %218 = vmatpush.msra.mxu0 %v140
  %219 = vmatmul.f32.gmra.mxu0 %v201
  %v220 = vpop.f32.mrf.mxu0
  %v221 = vadd.f32 0.0, %v220
  %222 = vdwg.mxu0
  %223 = vmatpush.msra.mxu0 0.0
  %224 = vmatpush.msra.mxu0 0.0
  %225 = vmatpush.msra.mxu0 0.0
  %226 = vmatpush.msra.mxu0 0.0
  %227 = vmatpush.msra.mxu0 0.0
  %228 = vmatpush.msra.mxu0 0.0
  %229 = vmatpush.msra.mxu0 0.0
  %230 = vmatpush.msra.mxu0 %v191
  %231 = vmatpush.msra.mxu0 %v190
  %232 = vmatpush.msra.mxu0 %v189
  %233 = vmatpush.msra.mxu0 %v85
  %234 = vmatpush.msra.mxu0 %v43
  %235 = vmatpush.msra.mxu0 %v67
  %236 = vmatpush.msra.mxu0 %v139
  %237 = vmatpush.msra.mxu0 %v138
  %238 = vmatpush.msra.mxu0 %v137
  %239 = vmatmul.f32.gmra.mxu0 %v201
  %v240 = vpop.f32.mrf.mxu0
  %v241 = vadd.f32 0.0, %v240
  %242 = vdwg.mxu0
  %243 = vmatpush.msra.mxu0 0.0
  %244 = vmatpush.msra.mxu0 0.0
  %245 = vmatpush.msra.mxu0 0.0
  %246 = vmatpush.msra.mxu0 0.0
  %247 = vmatpush.msra.mxu0 0.0
  %248 = vmatpush.msra.mxu0 0.0
  %249 = vmatpush.msra.mxu0 0.0
  %250 = vmatpush.msra.mxu0 %v188
  %251 = vmatpush.msra.mxu0 %v187
  %252 = vmatpush.msra.mxu0 %v186
  %253 = vmatpush.msra.mxu0 %v84
  %254 = vmatpush.msra.mxu0 %v44
  %255 = vmatpush.msra.mxu0 %v66
  %256 = vmatpush.msra.mxu0 %v136
  %257 = vmatpush.msra.mxu0 %v135
  %258 = vmatpush.msra.mxu0 %v134
  %259 = vmatmul.f32.gmra.mxu0 %v201
  %v260 = vpop.f32.mrf.mxu0
  %v261 = vadd.f32 0.0, %v260
  %262 = vdwg.mxu0
  %263 = vmatpush.msra.mxu0 0.0
  %264 = vmatpush.msra.mxu0 0.0
  %265 = vmatpush.msra.mxu0 0.0
  %266 = vmatpush.msra.mxu0 0.0
  %267 = vmatpush.msra.mxu0 0.0
  %268 = vmatpush.msra.mxu0 0.0
  %269 = vmatpush.msra.mxu0 0.0
  %270 = vmatpush.msra.mxu0 %v185
  %271 = vmatpush.msra.mxu0 %v184
  %272 = vmatpush.msra.mxu0 %v183
  %273 = vmatpush.msra.mxu0 %v83
  %274 = vmatpush.msra.mxu0 %v45
  %275 = vmatpush.msra.mxu0 %v65
  %276 = vmatpush.msra.mxu0 %v133
  %277 = vmatpush.msra.mxu0 %v132
  %278 = vmatpush.msra.mxu0 %v131
  %279 = vmatmul.f32.gmra.mxu0 %v201
  %v280 = vpop.f32.mrf.mxu0
  %v281 = vadd.f32 0.0, %v280
  %282 = vdwg.mxu0
  %283 = vmatpush.msra.mxu0 0.0
  %284 = vmatpush.msra.mxu0 0.0
  %285 = vmatpush.msra.mxu0 0.0
  %286 = vmatpush.msra.mxu0 0.0
  %287 = vmatpush.msra.mxu0 0.0
  %288 = vmatpush.msra.mxu0 0.0
  %289 = vmatpush.msra.mxu0 0.0
  %290 = vmatpush.msra.mxu0 %v182
  %291 = vmatpush.msra.mxu0 %v181
  %292 = vmatpush.msra.mxu0 %v180
  %293 = vmatpush.msra.mxu0 %v82
  %294 = vmatpush.msra.mxu0 %v46
  %295 = vmatpush.msra.mxu0 %v64
  %296 = vmatpush.msra.mxu0 %v130
  %297 = vmatpush.msra.mxu0 %v129
  %298 = vmatpush.msra.mxu0 %v128
  %299 = vmatmul.f32.gmra.mxu0 %v201
  %v300 = vpop.f32.mrf.mxu0
  %v301 = vadd.f32 0.0, %v300
  %302 = vdwg.mxu0
  %303 = vmatpush.msra.mxu0 0.0
  %304 = vmatpush.msra.mxu0 0.0
  %305 = vmatpush.msra.mxu0 0.0
  %306 = vmatpush.msra.mxu0 0.0
  %307 = vmatpush.msra.mxu0 0.0
  %308 = vmatpush.msra.mxu0 0.0
  %309 = vmatpush.msra.mxu0 0.0
  %310 = vmatpush.msra.mxu0 %v197
  %311 = vmatpush.msra.mxu0 %v196
  %312 = vmatpush.msra.mxu0 %v195
  %313 = vmatpush.msra.mxu0 %v87
  %314 = vmatpush.msra.mxu0 %v47
  %315 = vmatpush.msra.mxu0 %v63
  %316 = vmatpush.msra.mxu0 %v127
  %317 = vmatpush.msra.mxu0 %v126
  %318 = vmatpush.msra.mxu0 %v125
  %319 = vmatmul.f32.gmra.mxu0 %v201
  %v320 = vpop.f32.mrf.mxu0
  %v321 = vadd.f32 0.0, %v320
  %322 = vdwg.mxu0
  %v323 = vmax.f32 %v221, 0.0
  %v324 = vmax.f32 %v241, 0.0
  %v325 = vmax.f32 %v261, 0.0
  %v326 = vmax.f32 %v281, 0.0
  %v327 = vmax.f32 %v301, 0.0
  %v328 = vmax.f32 %v321, 0.0
  %v330 = vperm.slane %v23, 0
  %v331 = vperm.slane %v23, 1
  %v332 = vperm.slane %v23, 2
  %v333 = vperm.slane %v23, 3
  %v334 = vperm.slane %v23, 4
  %v335 = vperm.slane %v23, 5
  %v342 = vmul.f32 %v323, %v330
  %v343 = vmul.f32 %v324, %v331
  %v344 = vmul.f32 %v325, %v332
  %v345 = vmul.f32 %v326, %v333
  %v346 = vmul.f32 %v327, %v334
  %v347 = vmul.f32 %v328, %v335
  %348 = vrot.lane.b32.xlu0 %v342, 18
  %v349 = vpop.permute.xlu0 %348
  %350 = vrot.lane.b32.xlu0 %v343, 18
  %v351 = vpop.permute.xlu0 %350
  %352 = vrot.lane.b32.xlu0 %v344, 18
  %v353 = vpop.permute.xlu0 %352
  %354 = vrot.lane.b32.xlu0 %v345, 18
  %v355 = vpop.permute.xlu0 %354
  %356 = vrot.lane.b32.xlu0 %v346, 18
  %v357 = vpop.permute.xlu0 %356
  %358 = vrot.lane.b32.xlu0 %v347, 18
  %v359 = vpop.permute.xlu0 %358
  %v360 = vsel %vm62, %v357, %v359
  %v361 = vsel %vm62, %v355, %v357
  %v362 = vsel %vm62, %v353, %v355
  %v363 = vsel %vm62, %v351, %v353
  %v364 = vsel %vm62, %v349, %v351
  %v365 = vsel %vm62, %v359, %v349
  %366 = vrot.lane.b32.xlu0 %v342, 110
  %v367 = vpop.permute.xlu0 %366
  %368 = vrot.lane.b32.xlu0 %v343, 110
  %v369 = vpop.permute.xlu0 %368
  %370 = vrot.lane.b32.xlu0 %v344, 110
  %v371 = vpop.permute.xlu0 %370
  %372 = vrot.lane.b32.xlu0 %v345, 110
  %v373 = vpop.permute.xlu0 %372
  %374 = vrot.lane.b32.xlu0 %v346, 110
  %v375 = vpop.permute.xlu0 %374
  %376 = vrot.lane.b32.xlu0 %v347, 110
  %v377 = vpop.permute.xlu0 %376
  %v378 = vsel %vm81, %v375, %v377
  %v379 = vsel %vm81, %v373, %v375
  %v380 = vsel %vm81, %v371, %v373
  %v381 = vsel %vm81, %v369, %v371
  %v382 = vsel %vm81, %v367, %v369
  %v383 = vsel %vm81, %v377, %v367
  %384 = vrot.lane.b32.xlu0 %v365, 1
  %v385 = vpop.permute.xlu0 %384
  %386 = vrot.lane.b32.xlu0 %v342, 1
  %v387 = vpop.permute.xlu0 %386
  %388 = vrot.lane.b32.xlu0 %v382, 1
  %v389 = vpop.permute.xlu0 %388
  %390 = vrot.lane.b32.xlu0 %v364, 1
  %v391 = vpop.permute.xlu0 %390
  %392 = vrot.lane.b32.xlu0 %v343, 1
  %v393 = vpop.permute.xlu0 %392
  %394 = vrot.lane.b32.xlu0 %v381, 1
  %v395 = vpop.permute.xlu0 %394
  %396 = vrot.lane.b32.xlu0 %v363, 1
  %v397 = vpop.permute.xlu0 %396
  %398 = vrot.lane.b32.xlu0 %v344, 1
  %v399 = vpop.permute.xlu0 %398
  %400 = vrot.lane.b32.xlu0 %v380, 1
  %v401 = vpop.permute.xlu0 %400
  %402 = vrot.lane.b32.xlu0 %v362, 1
  %v403 = vpop.permute.xlu0 %402
  %404 = vrot.lane.b32.xlu0 %v345, 1
  %v405 = vpop.permute.xlu0 %404
  %406 = vrot.lane.b32.xlu0 %v379, 1
  %v407 = vpop.permute.xlu0 %406
  %408 = vrot.lane.b32.xlu0 %v361, 1
  %v409 = vpop.permute.xlu0 %408
  %410 = vrot.lane.b32.xlu0 %v346, 1
  %v411 = vpop.permute.xlu0 %410
  %412 = vrot.lane.b32.xlu0 %v378, 1
  %v413 = vpop.permute.xlu0 %412
  %414 = vrot.lane.b32.xlu0 %v360, 1
  %v415 = vpop.permute.xlu0 %414
  %416 = vrot.lane.b32.xlu0 %v347, 1
  %v417 = vpop.permute.xlu0 %416
  %418 = vrot.lane.b32.xlu0 %v383, 1
  %v419 = vpop.permute.xlu0 %418
  %v420 = vsel %vm124, %v409, %v415
  %v421 = vsel %vm124, %v411, %v417
  %v422 = vsel %vm124, %v413, %v419
  %v423 = vsel %vm124, %v403, %v409
  %v424 = vsel %vm124, %v405, %v411
  %v425 = vsel %vm124, %v407, %v413
  %v426 = vsel %vm124, %v397, %v403
  %v427 = vsel %vm124, %v399, %v405
  %v428 = vsel %vm124, %v401, %v407
  %v429 = vsel %vm124, %v391, %v397
  %v430 = vsel %vm124, %v393, %v399
  %v431 = vsel %vm124, %v395, %v401
  %v432 = vsel %vm124, %v385, %v391
  %v433 = vsel %vm124, %v387, %v393
  %v434 = vsel %vm124, %v389, %v395
  %v435 = vsel %vm124, %v415, %v385
  %v436 = vsel %vm124, %v417, %v387
  %v437 = vsel %vm124, %v419, %v389
  %438 = vrot.lane.b32.xlu0 %v365, 127
  %v439 = vpop.permute.xlu0 %438
  %440 = vrot.lane.b32.xlu0 %v342, 127
  %v441 = vpop.permute.xlu0 %440
  %442 = vrot.lane.b32.xlu0 %v382, 127
  %v443 = vpop.permute.xlu0 %442
  %444 = vrot.lane.b32.xlu0 %v364, 127
  %v445 = vpop.permute.xlu0 %444
  %446 = vrot.lane.b32.xlu0 %v343, 127
  %v447 = vpop.permute.xlu0 %446
  %448 = vrot.lane.b32.xlu0 %v381, 127
  %v449 = vpop.permute.xlu0 %448
  %450 = vrot.lane.b32.xlu0 %v363, 127
  %v451 = vpop.permute.xlu0 %450
  %452 = vrot.lane.b32.xlu0 %v344, 127
  %v453 = vpop.permute.xlu0 %452
  %454 = vrot.lane.b32.xlu0 %v380, 127
  %v455 = vpop.permute.xlu0 %454
  %456 = vrot.lane.b32.xlu0 %v362, 127
  %v457 = vpop.permute.xlu0 %456
  %458 = vrot.lane.b32.xlu0 %v345, 127
  %v459 = vpop.permute.xlu0 %458
  %460 = vrot.lane.b32.xlu0 %v379, 127
  %v461 = vpop.permute.xlu0 %460
  %462 = vrot.lane.b32.xlu0 %v361, 127
  %v463 = vpop.permute.xlu0 %462
  %464 = vrot.lane.b32.xlu0 %v346, 127
  %v465 = vpop.permute.xlu0 %464
  %466 = vrot.lane.b32.xlu0 %v378, 127
  %v467 = vpop.permute.xlu0 %466
  %468 = vrot.lane.b32.xlu0 %v360, 127
  %v469 = vpop.permute.xlu0 %468
  %470 = vrot.lane.b32.xlu0 %v347, 127
  %v471 = vpop.permute.xlu0 %470
  %472 = vrot.lane.b32.xlu0 %v383, 127
  %v473 = vpop.permute.xlu0 %472
  %v474 = vsel %vm179, %v463, %v469
  %v475 = vsel %vm179, %v465, %v471
  %v476 = vsel %vm179, %v467, %v473
  %v477 = vsel %vm179, %v457, %v463
  %v478 = vsel %vm179, %v459, %v465
  %v479 = vsel %vm179, %v461, %v467
  %v480 = vsel %vm179, %v451, %v457
  %v481 = vsel %vm179, %v453, %v459
  %v482 = vsel %vm179, %v455, %v461
  %v483 = vsel %vm179, %v445, %v451
  %v484 = vsel %vm179, %v447, %v453
  %v485 = vsel %vm179, %v449, %v455
  %v486 = vsel %vm179, %v439, %v445
  %v487 = vsel %vm179, %v441, %v447
  %v488 = vsel %vm179, %v443, %v449
  %v489 = vsel %vm179, %v469, %v439
  %v490 = vsel %vm179, %v471, %v441
  %v491 = vsel %vm179, %v473, %v443
  %v492 = vld [vmem:[%s2] sm:$0xff]
  %v494 = vsel %vm199, %v492, 0
  %496 = vmatpush.msra.mxu0 0.0
  %497 = vmatpush.msra.mxu0 0.0
  %498 = vmatpush.msra.mxu0 0.0
  %499 = vmatpush.msra.mxu0 0.0
  %500 = vmatpush.msra.mxu0 0.0
  %501 = vmatpush.msra.mxu0 0.0
  %502 = vmatpush.msra.mxu0 0.0
  %503 = vmatpush.msra.mxu0 %v488
  %504 = vmatpush.msra.mxu0 %v487
  %505 = vmatpush.msra.mxu0 %v486
  %506 = vmatpush.msra.mxu0 %v382
  %507 = vmatpush.msra.mxu0 %v342
  %508 = vmatpush.msra.mxu0 %v365
  %509 = vmatpush.msra.mxu0 %v437
  %510 = vmatpush.msra.mxu0 %v436
  %511 = vmatpush.msra.mxu0 %v435
  %512 = vmatmul.f32.gmra.mxu0 %v494
  %v513 = vpop.f32.mrf.mxu0
  %v514 = vadd.f32 0.0, %v513
  %515 = vdwg.mxu0
  %516 = vmatpush.msra.mxu0 0.0
  %517 = vmatpush.msra.mxu0 0.0
  %518 = vmatpush.msra.mxu0 0.0
  %519 = vmatpush.msra.mxu0 0.0
  %520 = vmatpush.msra.mxu0 0.0
  %521 = vmatpush.msra.mxu0 0.0
  %522 = vmatpush.msra.mxu0 0.0
  %523 = vmatpush.msra.mxu0 %v485
  %524 = vmatpush.msra.mxu0 %v484
  %525 = vmatpush.msra.mxu0 %v483
  %526 = vmatpush.msra.mxu0 %v381
  %527 = vmatpush.msra.mxu0 %v343
  %528 = vmatpush.msra.mxu0 %v364
  %529 = vmatpush.msra.mxu0 %v434
  %530 = vmatpush.msra.mxu0 %v433
  %531 = vmatpush.msra.mxu0 %v432
  %532 = vmatmul.f32.gmra.mxu0 %v494
  %v533 = vpop.f32.mrf.mxu0
  %v534 = vadd.f32 0.0, %v533
  %535 = vdwg.mxu0
  %536 = vmatpush.msra.mxu0 0.0
  %537 = vmatpush.msra.mxu0 0.0
  %538 = vmatpush.msra.mxu0 0.0
  %539 = vmatpush.msra.mxu0 0.0
  %540 = vmatpush.msra.mxu0 0.0
  %541 = vmatpush.msra.mxu0 0.0
  %542 = vmatpush.msra.mxu0 0.0
  %543 = vmatpush.msra.mxu0 %v482
  %544 = vmatpush.msra.mxu0 %v481
  %545 = vmatpush.msra.mxu0 %v480
  %546 = vmatpush.msra.mxu0 %v380
  %547 = vmatpush.msra.mxu0 %v344
  %548 = vmatpush.msra.mxu0 %v363
  %549 = vmatpush.msra.mxu0 %v431
  %550 = vmatpush.msra.mxu0 %v430
  %551 = vmatpush.msra.mxu0 %v429
  %552 = vmatmul.f32.gmra.mxu0 %v494
  %v553 = vpop.f32.mrf.mxu0
  %v554 = vadd.f32 0.0, %v553
  %555 = vdwg.mxu0
  %556 = vmatpush.msra.mxu0 0.0
  %557 = vmatpush.msra.mxu0 0.0
  %558 = vmatpush.msra.mxu0 0.0
  %559 = vmatpush.msra.mxu0 0.0
  %560 = vmatpush.msra.mxu0 0.0
  %561 = vmatpush.msra.mxu0 0.0
  %562 = vmatpush.msra.mxu0 0.0
  %563 = vmatpush.msra.mxu0 %v479
  %564 = vmatpush.msra.mxu0 %v478
  %565 = vmatpush.msra.mxu0 %v477
  %566 = vmatpush.msra.mxu0 %v379
  %567 = vmatpush.msra.mxu0 %v345
  %568 = vmatpush.msra.mxu0 %v362
  %569 = vmatpush.msra.mxu0 %v428
  %570 = vmatpush.msra.mxu0 %v427
  %571 = vmatpush.msra.mxu0 %v426
  %572 = vmatmul.f32.gmra.mxu0 %v494
  %v573 = vpop.f32.mrf.mxu0
  %v574 = vadd.f32 0.0, %v573
  %575 = vdwg.mxu0
  %576 = vmatpush.msra.mxu0 0.0
  %577 = vmatpush.msra.mxu0 0.0
  %578 = vmatpush.msra.mxu0 0.0
  %579 = vmatpush.msra.mxu0 0.0
  %580 = vmatpush.msra.mxu0 0.0
  %581 = vmatpush.msra.mxu0 0.0
  %582 = vmatpush.msra.mxu0 0.0
  %583 = vmatpush.msra.mxu0 %v476
  %584 = vmatpush.msra.mxu0 %v475
  %585 = vmatpush.msra.mxu0 %v474
  %586 = vmatpush.msra.mxu0 %v378
  %587 = vmatpush.msra.mxu0 %v346
  %588 = vmatpush.msra.mxu0 %v361
  %589 = vmatpush.msra.mxu0 %v425
  %590 = vmatpush.msra.mxu0 %v424
  %591 = vmatpush.msra.mxu0 %v423
  %592 = vmatmul.f32.gmra.mxu0 %v494
  %v593 = vpop.f32.mrf.mxu0
  %v594 = vadd.f32 0.0, %v593
  %595 = vdwg.mxu0
  %596 = vmatpush.msra.mxu0 0.0
  %597 = vmatpush.msra.mxu0 0.0
  %598 = vmatpush.msra.mxu0 0.0
  %599 = vmatpush.msra.mxu0 0.0
  %600 = vmatpush.msra.mxu0 0.0
  %601 = vmatpush.msra.mxu0 0.0
  %602 = vmatpush.msra.mxu0 0.0
  %603 = vmatpush.msra.mxu0 %v491
  %604 = vmatpush.msra.mxu0 %v490
  %605 = vmatpush.msra.mxu0 %v489
  %606 = vmatpush.msra.mxu0 %v383
  %607 = vmatpush.msra.mxu0 %v347
  %608 = vmatpush.msra.mxu0 %v360
  %609 = vmatpush.msra.mxu0 %v422
  %610 = vmatpush.msra.mxu0 %v421
  %611 = vmatpush.msra.mxu0 %v420
  %612 = vmatmul.f32.gmra.mxu0 %v494
  %v613 = vpop.f32.mrf.mxu0
  %v614 = vadd.f32 0.0, %v613
  %615 = vdwg.mxu0
  %vm616 = vcmp.gt.f32.partialorder %v514, 0.0
  %vm617 = vcmp.gt.f32.partialorder %v534, 0.0
  %vm618 = vcmp.gt.f32.partialorder %v554, 0.0
  %vm619 = vcmp.gt.f32.partialorder %v574, 0.0
  %vm620 = vcmp.gt.f32.partialorder %v594, 0.0
  %vm621 = vcmp.gt.f32.partialorder %v614, 0.0
  %v622 = vmul.f32 %v514, 0.2
  %v623 = vmul.f32 %v534, 0.2
  %v624 = vmul.f32 %v554, 0.2
  %v625 = vmul.f32 %v574, 0.2
  %v626 = vmul.f32 %v594, 0.2
  %v627 = vmul.f32 %v614, 0.2
  %v628 = vsel %vm616, %v514, %v622
  %v629 = vsel %vm617, %v534, %v623
  %v630 = vsel %vm618, %v554, %v624
  %v631 = vsel %vm619, %v574, %v625
  %v632 = vsel %vm620, %v594, %v626
  %v633 = vsel %vm621, %v614, %v627
  %v634 = vmul.f32 %v628, %v330
  %v635 = vmul.f32 %v629, %v331
  %v636 = vmul.f32 %v630, %v332
  %v637 = vmul.f32 %v631, %v333
  %v638 = vmul.f32 %v632, %v334
  %v639 = vmul.f32 %v633, %v335
  %v640 = vadd.f32 %v634, %v635
  %v641 = vadd.f32 %v640, %v636
  %v642 = vadd.f32 %v641, %v637
  %v643 = vadd.f32 %v642, %v638
  %v644 = vadd.f32 %v643, %v639
  %645 = vadd.xlane.f32.xlu0 %v644
  %v646 = vpop.xlane.xlu0 %645
  %v647 = vrcp.pop 512.0
  %v648 = vmul.f32 512.0, %v647
  %v649 = vsub.f32 1.0, %v648
  %v650 = vmul.f32 %v647, %v649
  %v651 = vadd.f32 %v647, %v650
  %vm652 = vweird.f32 %v647
  %v653 = vsel %vm652, %v647, %v651
  %v654 = vmul.f32 %v646, %v653
  %v655 = vsub.f32 %v628, %v654
  %v656 = vsub.f32 %v629, %v654
  %v657 = vsub.f32 %v630, %v654
  %v658 = vsub.f32 %v631, %v654
  %v659 = vsub.f32 %v632, %v654
  %v660 = vsub.f32 %v633, %v654
  %v661 = vmul.f32 %v655, %v330
  %v662 = vmul.f32 %v656, %v331
  %v663 = vmul.f32 %v657, %v332
  %v664 = vmul.f32 %v658, %v333
  %v665 = vmul.f32 %v659, %v334
  %v666 = vmul.f32 %v660, %v335
  %v667 = vmul.f32 %v661, %v661
  %v668 = vmul.f32 %v662, %v662
  %v669 = vmul.f32 %v663, %v663
  %v670 = vmul.f32 %v664, %v664
  %v671 = vmul.f32 %v665, %v665
  %v672 = vmul.f32 %v666, %v666
  %v673 = vadd.f32 %v667, %v668
  %v674 = vadd.f32 %v673, %v669
  %v675 = vadd.f32 %v674, %v670
  %v676 = vadd.f32 %v675, %v671
  %v677 = vadd.f32 %v676, %v672
  %678 = vadd.xlane.f32.xlu0 %v677
  %v679 = vpop.xlane.xlu0 %678
  %v680 = vmul.f32 %v679, %v653
  %v681 = vadd.f32 %v680, 1e-05
  %v682 = vrsqrt.pop %v681
  %v683 = vmul.f32 %v682, %v681
  %v684 = vmul.f32 %v683, %v682
  %v685 = vmul.f32 0.5, %v684
  %v686 = vsub.f32 1.5, %v685
  %v687 = vmul.f32 %v682, %v686
  %vm688 = vweird.f32 %v681
  %vm689 = vweird.f32 %v682
  %vm690 = vmor %vm688, %vm689
  %v691 = vsel %vm690, %v682, %v687
  %v692 = vmul.f32 %v655, %v691
  %v693 = vmul.f32 %v656, %v691
  %v694 = vmul.f32 %v657, %v691
  %v695 = vmul.f32 %v658, %v691
  %v696 = vmul.f32 %v659, %v691
  %v697 = vmul.f32 %v660, %v691
  %v698 = vld [vmem:[%s3] sm:$0xff]
  %700 = vset.pattern.permute.xlu0 0
  %701 = vperm.xlu0 %700, %v698
  %v702 = vpop.permute.xlu0 %701
  %v704 = vmul.f32 %v692, %v702
  %v705 = vmul.f32 %v693, %v702
  %v706 = vmul.f32 %v694, %v702
  %v707 = vmul.f32 %v695, %v702
  %v708 = vmul.f32 %v696, %v702
  %v709 = vmul.f32 %v697, %v702
  %v710 = vld [vmem:[%s4] sm:$0xff]
  %712 = vset.pattern.permute.xlu0 0
  %713 = vperm.xlu0 %712, %v710
  %v714 = vpop.permute.xlu0 %713
  %v716 = vadd.f32 %v704, %v714
  %v717 = vadd.f32 %v705, %v714
  %v718 = vadd.f32 %v706, %v714
  %v719 = vadd.f32 %v707, %v714
  %v720 = vadd.f32 %v708, %v714
  %v721 = vadd.f32 %v709, %v714
  %722 = vst [vmem:[%s6] sm:$0xff] %v716
  %723 = vst [vmem:[%s6 + $0x8] sm:$0xff] %v717
  %724 = vst [vmem:[%s6 + $0x10] sm:$0xff] %v718
  %725 = vst [vmem:[%s6 + $0x18] sm:$0xff] %v719
  %726 = vst [vmem:[%s6 + $0x20] sm:$0xff] %v720
  %727 = vst [vmem:[%s6 + $0x28] sm:$0xff] %v721
  // Predicated region
  $region26: #{unet_skip_block_dc.1} parent=0 // pred_check
    _
  $region27: #{unet_skip_block_dc.1} parent=0 // pred_check_branch
    %729 = sbr.rel (0) target = $region29
  $region28: #{unet_skip_block_dc.1} parent=0 // pred_region
    _
  $region29: #{unet_skip_block_dc.1} parent=0 // pred_fallthru
    _
  // Predicated region
  $region30: #{unet_skip_block_dc.1} parent=0 // pred_check
    _
  $region31: #{unet_skip_block_dc.1} parent=0 // pred_check_branch
    %731 = sbr.rel (0) target = $region33
  $region32: #{unet_skip_block_dc.1} parent=0 // pred_region
    _
  $region33: #{unet_skip_block_dc.1} parent=0 // pred_fallthru
    _

</llo_original>
